<compile_context>
chip_gen: v6e
topology: v6e:2x2x1
jax: 0.10.0
libtpu: 0.0.40
codegen_flags: <defaults>
</compile_context>

<pallas_src>
import functools

import numpy as np
import jax
import jax.numpy as jnp
from jax import lax
from jax.experimental import pallas as pl
from jax.experimental.pallas import tpu as pltpu

COMPUTE_DTYPE = jnp.bfloat16     # exact for 0/+-1 operands; MXU-friendly on v5e/v6e/v7x
CARRY_DTYPE = jnp.int16          # residual carry between blocks (tiny magnitudes)
BN_EPS = 1e-5                    # torch BatchNorm1d default eps
LANE = 128
VMEM_LIMIT_BYTES = 64 * 1024 * 1024


# -----------------------------------------------------------------------------
# wrapper-side bit unpacking / weight re-encoding (one-time glue, not hot path)
# -----------------------------------------------------------------------------
def _unpack_words(packed):
    """[..., W] int32 packed bits -> [..., 32*W] int32 in {0,1} (little-endian)."""
    shifts = jnp.arange(32, dtype=jnp.int32)
    bits = (packed[..., None] >> shifts) & jnp.int32(1)          # [..., W, 32]
    return bits.reshape(*packed.shape[:-1], packed.shape[-1] * 32)


def unpack_input(x_packed):
    """Packed input [P, B, W] -> dense 0/1 activations [P*B, 32*W] (bf16)."""
    P, B, W = x_packed.shape
    return _unpack_words(x_packed).reshape(P * B, W * 32).astype(COMPUTE_DTYPE)


def prepare_layer(w_pos, w_neg, pad_to=None):
    """Packed (W, H) masks -> (D [32W, Hp] bf16 in {-1,0,1}, bias [1, Hp] f32)."""
    W, H = w_pos.shape
    pos = _unpack_words(w_pos.T)                                 # [H, 32W]
    neg = _unpack_words(w_neg.T)                                 # [H, 32W]
    d = (pos - neg).T.astype(COMPUTE_DTYPE)                      # [32W, H]
    bias = jnp.sum(neg, axis=1).astype(jnp.float32)[None, :]     # [1, H]
    if pad_to is not None and H < pad_to:
        d = jnp.pad(d, ((0, 0), (0, pad_to - H)))
        bias = jnp.pad(bias, ((0, 0), (0, pad_to - H)))
    return d, bias


# -----------------------------------------------------------------------------
# tiling / pipelining helpers
# -----------------------------------------------------------------------------
def _pick_tile(h, max_tile=512):
    """Output-column tile: multiple of 128 lanes, <= max_tile, and (when the
    size allows) giving >= 2 grid steps so both v7x TensorCores get work."""
    if h <= LANE:
        return h
    t = min(max_tile, h // 2)
    t = max(LANE, (t // LANE) * LANE)
    while h % t and t > LANE:
        t -= LANE
    return t if h % t == 0 else h


_SINGLE_BUFFER_OK = None


def _single_buffer_supported():
    """Probe (once) whether this jax build lowers pipeline_mode=pl.Buffered(1)."""
    global _SINGLE_BUFFER_OK
    if _SINGLE_BUFFER_OK is None:
        try:
            def _copy(x_ref, o_ref):
                o_ref[...] = x_ref[...]

            probe = pl.pallas_call(
                _copy,
                out_shape=jax.ShapeDtypeStruct((8, LANE), jnp.float32),
                grid=(2,),
                in_specs=[pl.BlockSpec((8, LANE), lambda i: (0, 0),
                                       pipeline_mode=pl.Buffered(1))],
                out_specs=pl.BlockSpec((8, LANE), lambda i: (0, 0)),
            )
            jax.block_until_ready(probe(jnp.zeros((8, LANE), jnp.float32)))
            _SINGLE_BUFFER_OK = True
        except Exception:
            _SINGLE_BUFFER_OK = False
    return _SINGLE_BUFFER_OK


def _resident_spec(block_shape, index_map):
    """BlockSpec for an input whose block index never changes over the grid:
    single-buffer it so only one VMEM copy is kept (halves its footprint,
    which matters for the big activation block on v7x's 64 MiB VMEM)."""
    if _single_buffer_supported():
        return pl.BlockSpec(block_shape, index_map, pipeline_mode=pl.Buffered(1))
    return pl.BlockSpec(block_shape, index_map)


# -----------------------------------------------------------------------------
# Kernel 1: fused hidden block =
#   binary_forward_cuda (+-1 MXU matmul, bias dropped: cancels under BN)
#   + MyBatchNorm (training batch stats) + .long() + residual add.
#   The 0/1 bits for the next layer are derived by the consumer kernel.
# -----------------------------------------------------------------------------
def _bn_trunc(counts):
    """BatchNorm1d (training stats, gamma=1, beta=0) + trunc-to-int, one sweep:
    var = E[x^2] - mean^2, clamped >= 0 against f32 cancellation."""
    inv_n = 1.0 / counts.shape[0]
    mean = jnp.sum(counts, axis=0, keepdims=True) * inv_n
    ex2 = jnp.sum(counts * counts, axis=0, keepdims=True) * inv_n
    var = jnp.maximum(ex2 - mean * mean, 0.0)
    y = (counts - mean) * lax.rsqrt(var + BN_EPS)                # rsqrt -> EUP slot
    return y.astype(jnp.int32)                                   # trunc == torch .long()


def _first_block_kernel(xb_ref, d_ref, bn_ref):
    # xb_ref: dense 0/1 input bits (bf16).  Residual carry starts at zero.
    counts = jnp.dot(xb_ref[...], d_ref[...], preferred_element_type=jnp.float32)
    bn_ref[...] = _bn_trunc(counts).astype(bn_ref.dtype)


def _mid_block_kernel(xprev_ref, d_ref, resid_ref, bn_ref):
    # xprev_ref: previous block's int16 carry; bits derived on the fly.
    # TODO(synk): consolidate_bits_cuda threshold assumed to be (value > 0).
    xb = (xprev_ref[...] > 0).astype(COMPUTE_DTYPE)
    counts = jnp.dot(xb, d_ref[...], preferred_element_type=jnp.float32)
    bn = _bn_trunc(counts) + resid_ref[...].astype(jnp.int32)
    bn_ref[...] = bn.astype(bn_ref.dtype)


def fused_block(x_in, d, *, first, max_tile=512):
    """counts-matmul + BatchNorm(train) + .long() + residual, tiled over output
    columns.  Returns the new int16 residual carry [N, H]."""
    n, k = x_in.shape
    h = d.shape[1]
    th = _pick_tile(h, max_tile)
    assert h % th == 0, (h, th)
    x_spec = _resident_spec((n, k), lambda i: (0, 0))
    d_spec = pl.BlockSpec((k, th), lambda i: (0, i))
    out_spec = pl.BlockSpec((n, th), lambda i: (0, i))
    if first:
        kernel = _first_block_kernel
        in_specs = [x_spec, d_spec]
        operands = (x_in, d)
    else:
        assert k == h, "residual add requires square hidden blocks"
        # x_in is passed twice: full (for bits / matmul, fetched once since its
        # block index is constant) and as the per-tile residual slice.
        resid_spec = pl.BlockSpec((n, th), lambda i: (0, i))
        kernel = _mid_block_kernel
        in_specs = [x_spec, d_spec, resid_spec]
        operands = (x_in, d, x_in)
    # TODO(synk): for production batch sizes the N axis should also be tiled
    # ('arbitrary' grid axis + two-pass BN stats in VMEM scratch); at the small
    # shapes used here the whole batch fits comfortably in VMEM.
    return pl.pallas_call(
        kernel,
        out_shape=jax.ShapeDtypeStruct((n, h), CARRY_DTYPE),
        grid=(h // th,),
        in_specs=in_specs,
        out_specs=out_spec,
        compiler_params=pltpu.CompilerParams(
            dimension_semantics=("parallel",),   # BN is per-column: H tiles independent
            vmem_limit_bytes=VMEM_LIMIT_BYTES,
        ),
    )(*operands)


# -----------------------------------------------------------------------------
# Kernel 2: final binary layer (bits -> matmul + bias) + x ** temperature
# -----------------------------------------------------------------------------
def _final_kernel(xprev_ref, d_ref, bias_ref, out_ref, *, temperature):
    xb = (xprev_ref[...] > 0).astype(COMPUTE_DTYPE)
    counts = bias_ref[...] + jnp.dot(xb, d_ref[...], preferred_element_type=jnp.float32)
    # counts are non-negative integers; x ** t with 0 ** t == 0 (matches torch).
    safe = jnp.maximum(counts, 1.0)
    powed = jnp.exp(temperature * jnp.log(safe))                 # EUP exp/log
    out_ref[...] = jnp.where(counts > 0.0, powed, 0.0)


def final_layer(bn, d_pad, bias_pad, *, temperature, out_size, max_tile=512):
    n, k = bn.shape
    hp = d_pad.shape[1]                         # padded to a multiple of 128 lanes
    th = _pick_tile(hp, max_tile)
    out = pl.pallas_call(
        functools.partial(_final_kernel, temperature=temperature),
        out_shape=jax.ShapeDtypeStruct((n, hp), jnp.float32),
        grid=(hp // th,),
        in_specs=[
            _resident_spec((n, k), lambda i: (0, 0)),
            pl.BlockSpec((k, th), lambda i: (0, i)),
            pl.BlockSpec((1, th), lambda i: (0, i)),
        ],
        out_specs=pl.BlockSpec((n, th), lambda i: (0, i)),
        compiler_params=pltpu.CompilerParams(
            dimension_semantics=("parallel",),
            vmem_limit_bytes=VMEM_LIMIT_BYTES,
        ),
    )(bn, d_pad, bias_pad)
    return out[:, :out_size]


# -----------------------------------------------------------------------------
# Full forward of EvoBinarizedOptimizedImproved1 (residual=True, batch_norm,
# training-mode BN statistics).
# -----------------------------------------------------------------------------
def evo_forward(x_packed, block_params, final_params, output_size, temperature):
    p, b, _ = x_packed.shape
    xb = unpack_input(x_packed)                                  # [P*B, 32*W] 0/1 bf16
    bn = fused_block(xb, block_params[0][0], first=True)
    for d, _unused_bias in block_params[1:]:
        bn = fused_block(bn, d, first=False)
    d_f, bias_f = final_params
    out = final_layer(bn, d_f, bias_f, temperature=temperature, out_size=output_size)
    return out.reshape(p, b, output_size)


# -----------------------------------------------------------------------------
# Pure-JAX references for checking
# -----------------------------------------------------------------------------
def binary_counts_ref(x_packed, w_pos, w_neg):
    """Exact packed-popcount reference of binary_forward_cuda (thresh 0, no xor).
    TODO(synk): count[p,b,o] = sum_w popcount((x & w_pos) | (~x & w_neg)) assumed."""
    m = (x_packed[:, :, :, None] & w_pos[None, None]) | \
        (~x_packed[:, :, :, None] & w_neg[None, None])
    return jnp.sum(lax.population_count(m), axis=2).astype(jnp.int32)


def fused_block_ref(x_bits, d, bias, resid):
    """Two-pass-BN reference WITH the bias (checks that dropping it in-kernel is
    semantics-preserving) + trunc + residual."""
    counts = bias + jnp.dot(x_bits.astype(jnp.float32), d.astype(jnp.float32))
    mean = jnp.mean(counts, axis=0, keepdims=True)
    var = jnp.mean((counts - mean) ** 2, axis=0, keepdims=True)
    y = (counts - mean) * lax.rsqrt(var + BN_EPS)
    return y.astype(jnp.int32) + resid


def final_layer_ref(bn, d, bias, temperature, out_size):
    xb = (bn > 0).astype(jnp.float32)
    counts = bias + jnp.dot(xb, d.astype(jnp.float32))
    out = jnp.where(counts > 0, jnp.power(counts, temperature), 0.0)
    return out[:, :out_size]


def _rand_bits(key, shape):
    return lax.bitcast_convert_type(jax.random.bits(key, shape, dtype=jnp.uint32),
                                    jnp.int32)


if __name__ == "__main__":
    # Small config consistent with the module (input a multiple of the word size).
    INPUT_SIZE = 256
    HIDDEN = 256
    OUTPUT = 10
    LAYERS = 2
    TEMPERATURE = 0.8
    P, B = 2, 64            # N = P*B = 128 rows: keeps the MXU fed (review feedback)

    in_words = INPUT_SIZE // 32
    hid_words = HIDDEN // 32

    key = jax.random.PRNGKey(0)
    k_x, *k_w = jax.random.split(key, 1 + 2 * (LAYERS + 1))

    # packed-bit input  x: [P, B, in_words] int32
    x_packed = _rand_bits(k_x, (P, B, in_words))

    # deterministic random packed weight words, split into (pos-mask, neg-mask)
    packed_block_w = []
    layer_in_words = in_words
    for i in range(LAYERS):
        wpos = _rand_bits(k_w[2 * i], (layer_in_words, HIDDEN))
        wneg = _rand_bits(k_w[2 * i + 1], (layer_in_words, HIDDEN))
        packed_block_w.append((wpos, wneg))
        layer_in_words = hid_words
    wpos_f = _rand_bits(k_w[2 * LAYERS], (hid_words, OUTPUT))
    wneg_f = _rand_bits(k_w[2 * LAYERS + 1], (hid_words, OUTPUT))

    # one-time weight re-encoding into the +-1 matmul form (same parameters)
    block_params = [prepare_layer(wp, wn) for (wp, wn) in packed_block_w]
    OUT_PAD = ((OUTPUT + LANE - 1) // LANE) * LANE
    final_params = prepare_layer(wpos_f, wneg_f, pad_to=OUT_PAD)

    # check 1: the +-1 matmul reformulation reproduces packed popcounts exactly
    xb0 = unpack_input(x_packed)
    d0, bias0 = block_params[0]
    counts_ref = binary_counts_ref(x_packed, *packed_block_w[0]).reshape(P * B, HIDDEN)
    counts_mm = (bias0 + jnp.dot(xb0.astype(jnp.float32),
                                 d0.astype(jnp.float32))).astype(jnp.int32)
    assert bool(jnp.all(counts_mm == counts_ref)), "matmul reformulation mismatch"

    # check 2: first fused block (bias dropped, one-sweep BN) vs reference
    bn0 = jax.block_until_ready(fused_block(xb0, d0, first=True))
    bn0_ref = fused_block_ref(xb0, d0, bias0, 0)
    assert int(jnp.max(jnp.abs(bn0.astype(jnp.int32) - bn0_ref))) <= 1, "block0 mismatch"

    # check 3: middle fused block (bits derived from the int16 carry + residual)
    d1, bias1 = block_params[1]
    bn1 = jax.block_until_ready(fused_block(bn0, d1, first=False))
    bits1 = (bn0 > 0).astype(jnp.float32)
    bn1_ref = fused_block_ref(bits1, d1, bias1, bn0.astype(jnp.int32))
    assert int(jnp.max(jnp.abs(bn1.astype(jnp.int32) - bn1_ref))) <= 1, "block1 mismatch"

    # check 4: final layer kernel vs plain-JAX reference
    out_k = jax.block_until_ready(
        final_layer(bn1, *final_params, temperature=TEMPERATURE, out_size=OUTPUT))
    out_r = final_layer_ref(bn1, *final_params, TEMPERATURE, OUTPUT)
    assert np.allclose(np.asarray(out_k), np.asarray(out_r), rtol=1e-3, atol=1e-3), \
        "final layer mismatch"

    # full forward
    out = evo_forward(x_packed, block_params, final_params, OUTPUT, TEMPERATURE)
    out = jax.block_until_ready(out)
    assert out.shape == (P, B, OUTPUT) and out.dtype == jnp.float32
    assert bool(jnp.all(jnp.isfinite(out)))

    print("KERNEL_OK")
</pallas_src>

<mosaic_0001>
module attributes {stable_mosaic.version = 11 : i64} {
  func.func @_copy(%arg0: i32, %arg1: memref<8x128xf32, #tpu.memory_space<vmem>>, %arg2: memref<8x128xf32, #tpu.memory_space<vmem>>) attributes {dimension_semantics = [#tpu.dimension_semantics<arbitrary>], iteration_bounds = array<i64: 2>, scalar_prefetch = 0 : i64, scratch_operands = 0 : i64, tpu.core_type = #tpu.core_type<tc>, window_params = [{pipeline_mode = #tpu.pipeline_mode<synchronous>, transform_indices = @transform_0, window_bounds = array<i64: 8, 128>}, {pipeline_mode = #tpu.pipeline_mode<synchronous>, transform_indices = @transform_1, window_bounds = array<i64: 8, 128>}]} {
    %c0 = arith.constant 0 : index
    %c0_0 = arith.constant 0 : index
    %0 = vector.load %arg1[%c0, %c0_0] : memref<8x128xf32, #tpu.memory_space<vmem>>, vector<8x128xf32>
    %c0_1 = arith.constant 0 : index
    %c0_2 = arith.constant 0 : index
    %1 = vector.load %arg2[%c0_1, %c0_2] : memref<8x128xf32, #tpu.memory_space<vmem>>, vector<8x128xf32>
    tpu.vector_store %arg2[%c0_1, %c0_2], %0 {strides = array<i32>} : memref<8x128xf32, #tpu.memory_space<vmem>>, vector<8x128xf32>,
    return
  }
  func.func @transform_0(%arg0: i32) -> (i32, i32) {
    %c0_i32 = arith.constant 0 : i32
    %c0_i32_0 = arith.constant 0 : i32
    %c0_i32_1 = arith.constant 0 : i32
    return %c0_i32, %c0_i32_0 : i32, i32
  }
  func.func @transform_1(%arg0: i32) -> (i32, i32) {
    %c0_i32 = arith.constant 0 : i32
    %c0_i32_0 = arith.constant 0 : i32
    %c0_i32_1 = arith.constant 0 : i32
    return %c0_i32, %c0_i32_0 : i32, i32
  }
}

module attributes {stable_mosaic.version = 11 : i64} {
  func.func @_first_block_kernel(%arg0: i32, %arg1: memref<128x256xbf16, #tpu.memory_space<vmem>>, %arg2: memref<256x128xbf16, #tpu.memory_space<vmem>>, %arg3: memref<128x128xi16, #tpu.memory_space<vmem>>) attributes {dimension_semantics = [#tpu.dimension_semantics<parallel>], iteration_bounds = array<i64: 2>, scalar_prefetch = 0 : i64, scratch_operands = 0 : i64, tpu.core_type = #tpu.core_type<tc>, window_params = [{pipeline_mode = #tpu.pipeline_mode<synchronous>, transform_indices = @transform_0, window_bounds = array<i64: 128, 256>}, {transform_indices = @transform_1, window_bounds = array<i64: 256, 128>}, {transform_indices = @transform_2, window_bounds = array<i64: 128, 128>}]} {
    %c0 = arith.constant 0 : index
    %c0_0 = arith.constant 0 : index
    %0 = vector.load %arg1[%c0, %c0_0] : memref<128x256xbf16, #tpu.memory_space<vmem>>, vector<128x256xbf16>
    %c0_1 = arith.constant 0 : index
    %c0_2 = arith.constant 0 : index
    %1 = vector.load %arg2[%c0_1, %c0_2] : memref<256x128xbf16, #tpu.memory_space<vmem>>, vector<256x128xbf16>
    %cst = arith.constant dense<0.000000e+00> : vector<128x128xf32>
    %2 = tpu.matmul %0, %1, %cst {dimension_numbers = #tpu.dot_dimension_numbers<[1], [0], [0], [1], [0, 0, 1, 1], [], []>} : vector<128x256xbf16>, vector<256x128xbf16>, vector<128x128xf32> -> vector<128x128xf32>
    %cst_3 = arith.constant dense<0.000000e+00> : vector<128xf32>
    %3 = vector.multi_reduction <add>, %2, %cst_3 [0] : vector<128x128xf32> to vector<128xf32>
    %4 = vector.shape_cast %3 : vector<128xf32> to vector<1x128xf32>
    %cst_4 = arith.constant 7.812500e-03 : f32
    %5 = vector.broadcast %cst_4 : f32 to vector<1x128xf32>
    %6 = arith.mulf %4, %5 : vector<1x128xf32>
    %7 = arith.mulf %2, %2 : vector<128x128xf32>
    %cst_5 = arith.constant dense<0.000000e+00> : vector<128xf32>
    %8 = vector.multi_reduction <add>, %7, %cst_5 [0] : vector<128x128xf32> to vector<128xf32>
    %9 = vector.shape_cast %8 : vector<128xf32> to vector<1x128xf32>
    %cst_6 = arith.constant 7.812500e-03 : f32
    %10 = vector.broadcast %cst_6 : f32 to vector<1x128xf32>
    %11 = arith.mulf %9, %10 : vector<1x128xf32>
    %12 = arith.mulf %6, %6 : vector<1x128xf32>
    %13 = arith.subf %11, %12 : vector<1x128xf32>
    %cst_7 = arith.constant 0.000000e+00 : f32
    %14 = vector.broadcast %cst_7 : f32 to vector<1x128xf32>
    %15 = arith.maximumf %13, %14 : vector<1x128xf32>
    %16 = vector.broadcast %6 : vector<1x128xf32> to vector<128x128xf32>
    %17 = arith.subf %2, %16 : vector<128x128xf32>
    %cst_8 = arith.constant 9.99999974E-6 : f32
    %18 = vector.broadcast %cst_8 : f32 to vector<1x128xf32>
    %19 = arith.addf %15, %18 : vector<1x128xf32>
    %20 = math.rsqrt %19 : vector<1x128xf32>
    %21 = vector.broadcast %20 : vector<1x128xf32> to vector<128x128xf32>
    %22 = arith.mulf %17, %21 : vector<128x128xf32>
    %23 = arith.fptosi %22 : vector<128x128xf32> to vector<128x128xi32>
    %24 = arith.trunci %23 : vector<128x128xi32> to vector<128x128xi16>
    %c0_9 = arith.constant 0 : index
    %c0_10 = arith.constant 0 : index
    %25 = vector.load %arg3[%c0_9, %c0_10] : memref<128x128xi16, #tpu.memory_space<vmem>>, vector<128x128xi16>
    tpu.vector_store %arg3[%c0_9, %c0_10], %24 {strides = array<i32>} : memref<128x128xi16, #tpu.memory_space<vmem>>, vector<128x128xi16>,
    return
  }
  func.func @transform_0(%arg0: i32) -> (i32, i32) {
    %c0_i32 = arith.constant 0 : i32
    %c0_i32_0 = arith.constant 0 : i32
    %c0_i32_1 = arith.constant 0 : i32
    return %c0_i32, %c0_i32_0 : i32, i32
  }
  func.func @transform_1(%arg0: i32) -> (i32, i32) {
    %c0_i32 = arith.constant 0 : i32
    %c0_i32_0 = arith.constant 0 : i32
    return %c0_i32, %arg0 : i32, i32
  }
  func.func @transform_2(%arg0: i32) -> (i32, i32) {
    %c0_i32 = arith.constant 0 : i32
    %c0_i32_0 = arith.constant 0 : i32
    return %c0_i32, %arg0 : i32, i32
  }
}

</mosaic_0001>

<llo_original>
// kernel: tpu_custom_call.1
$region0: #{tpu_custom_call.1}
  #allocation0 [shape = 'u32[]', space=smem, size = 0x4, offset = 0x4, fixed_abs, tag = 'smem constant byte address 0x4 - core index']
  #allocation1 [shape = 'u32[144,128]{1,0:T(1,128)}', space=vmem, size = 0x12000, scoped, tag = 'internal scratch']
  %s0 = inlined_call_operand.hbm [shape: f32[8,128], index: 0, kind: input, shape index: {}]
  %s1 = inlined_call_operand.hbm [shape: f32[8,128], index: 1, kind: output, shape index: {}]
  %s2 = sld [smem:[#allocation0]]
  $region41: #{tpu_custom_call.1} parent=0
    _
  %s4 = ssub.s32 1, %s2
  %s5 = scalar_select 0, %s4, %s2
  $region1: #{tpu_custom_call.1} parent=0
    #allocation2 [shape = 'u8[4096]{0}', space=vmem, size = 0x1000, scoped, tag = 'input window, operand 0, single buffered']
    #allocation3 [shape = 's32[2]{0}', space=sflag, size = 0x8, scoped, tag = 'scoped memory for tpu_custom_call.1']
    #allocation4 [shape = 's32[2]{0}', space=sflag, size = 0x8, scoped, tag = 'scoped memory for tpu_custom_call.1']
    #allocation5 [shape = 'u8[4096]{0}', space=vmem, size = 0x1000, scoped, tag = 'output window, operand 0, single buffered']
    %6 = vsyncpa [#allocation3], 0
    %7 = vsyncpa [#allocation4], 0
    loop: start=0, step=1, limit=4
    $region2: #{tpu_custom_call.1} parent=1 // loop_pre_header
      _
    $region3: #{tpu_custom_call.1} parent=1 // loop_header
      %s9 = sphi 0, %s13
      %p10 = scmp.ge.s32.totalorder %s9, 4
      %s17 = sphi 0, %s17
      %s19 = sphi 0, %s17
      %s20 = sphi 0, %s19
      %s34 = sphi 0, %s20
      %s38 = sphi 0, %s38
      %s40 = sphi 0, %s38
      %s41 = sphi 0, %s40
      %s55 = sphi 0, %s41
    $region4: #{tpu_custom_call.1} parent=1 // loop_header_branch
      %12 = sbr.rel (%p10) target = $region8
    $region5: #{tpu_custom_call.1} parent=1 // loop_body
      %s14 = ssub.s32 %s9, 1
      %s15 = ssub.s32 %s9, 2
      %s16 = sadd.s32 %s9, 1
      %s18 = sadd.s32 %s17, 1
      %p21 = scmp.eq.s32.totalorder %s9, 1
      %p22 = scmp.ne.s32.totalorder %s17, %s19
      %p23 = scmp.eq.s32.totalorder %s9, 0
      %p24 = por %p22, %p23
      %p25 = scmp.ne.s32.totalorder %s17, %s19
      %p26 = scmp.eq.s32.totalorder %s14, 1
      %p27 = por %p25, %p26
      %p28 = scmp.ne.s32.totalorder %s19, %s20
      %p29 = scmp.eq.s32.totalorder %s14, 0
      %p30 = por %p28, %p29
      %p31 = scmp.ne.s32.totalorder %s19, %s20
      %p32 = scmp.eq.s32.totalorder %s15, 1
      %p33 = por %p31, %p32
      %p35 = scmp.ne.s32.totalorder %s20, %s34
      %p36 = scmp.eq.s32.totalorder %s15, 0
      %p37 = por %p35, %p36
      %s39 = sadd.s32 %s38, 1
      %p42 = scmp.eq.s32.totalorder %s9, 1
      %p43 = scmp.ne.s32.totalorder %s38, %s40
      %p44 = scmp.eq.s32.totalorder %s9, 0
      %p45 = por %p43, %p44
      %p46 = scmp.ne.s32.totalorder %s38, %s40
      %p47 = scmp.eq.s32.totalorder %s14, 1
      %p48 = por %p46, %p47
      %p49 = scmp.ne.s32.totalorder %s40, %s41
      %p50 = scmp.eq.s32.totalorder %s14, 0
      %p51 = por %p49, %p50
      %p52 = scmp.ne.s32.totalorder %s40, %s41
      %p53 = scmp.eq.s32.totalorder %s15, 1
      %p54 = por %p52, %p53
      %p56 = scmp.ne.s32.totalorder %s41, %s55
      %p57 = scmp.eq.s32.totalorder %s15, 0
      %p58 = por %p56, %p57
      %p59 = scmp.le.s32.totalorder 1, %s9
      %p60 = scmp.lt.s32.totalorder %s9, 3
      %p61 = pnand %p59, %p60
      %p62 = pneg %p61
      // Predicated region
      $region9: #{tpu_custom_call.1} parent=5 // pred_check
        _
      $region10: #{tpu_custom_call.1} parent=5 // pred_check_branch
        %64 = sbr.rel (%p61) target = $region12
      $region11: #{tpu_custom_call.1} parent=5 // pred_region
        %s65 = ssub.s32 %s9, 1
        // Predicated region
        $region13: #{tpu_custom_call.1} parent=11 // pred_check
          %p66 = pneg %p30
        $region14: #{tpu_custom_call.1} parent=11 // pred_check_branch
          %68 = sbr.rel (%p66) target = $region16
        $region15: #{tpu_custom_call.1} parent=11 // pred_region
          %s70 = ssub.s32 128, 128
          %71 = vsyncadd [#allocation3], %s70
          %s73 = sshll.u32 [#allocation2], 4
          %s74 = int_to_ptr.vmem [resolvable:$true] %s73
          %76 = dma.hbm_to_vmem [thread:$0]  %s0, 128, %s74, [#allocation3]
        $region16: #{tpu_custom_call.1} parent=11 // pred_fallthru
          _
      $region12: #{tpu_custom_call.1} parent=5 // pred_fallthru
        _
      %p77 = scmp.lt.s32.totalorder %s9, 2
      // Predicated region
      $region17: #{tpu_custom_call.1} parent=5 // pred_check
        %p78 = pneg %p77
      $region18: #{tpu_custom_call.1} parent=5 // pred_check_branch
        %80 = sbr.rel (%p78) target = $region20
      $region19: #{tpu_custom_call.1} parent=5 // pred_region
        _
      $region20: #{tpu_custom_call.1} parent=5 // pred_fallthru
        _
      %p81 = scmp.le.s32.totalorder 1, %s9
      %p82 = scmp.lt.s32.totalorder %s9, 3
      %p83 = pnand %p81, %p82
      %p84 = pneg %p83
      // Predicated region
      $region21: #{tpu_custom_call.1} parent=5 // pred_check
        _
      $region22: #{tpu_custom_call.1} parent=5 // pred_check_branch
        %86 = sbr.rel (%p83) target = $region24
      $region23: #{tpu_custom_call.1} parent=5 // pred_region
        %s87 = ssub.s32 %s9, 1
        // Predicated region
        $region25: #{tpu_custom_call.1} parent=23 // pred_check
          %p88 = pneg %p30
        $region26: #{tpu_custom_call.1} parent=23 // pred_check_branch
          %90 = sbr.rel (%p88) target = $region28
        $region27: #{tpu_custom_call.1} parent=23 // pred_region
          %91 = dma.done [#allocation3], 128
        $region28: #{tpu_custom_call.1} parent=23 // pred_fallthru
          _
        %p92 = pneg %p30
        %p93 = pneg %p27
        %p94 = pneg %p51
        %p95 = pneg %p48
        %v96 = vld [vmem:[#allocation2] sm:$0xff]
        %97 = vst [vmem:[#allocation5] sm:$0xff] %v96
        // Predicated region
        $region29: #{tpu_custom_call.1} parent=23 // pred_check
          %p98 = pneg %p48
        $region30: #{tpu_custom_call.1} parent=23 // pred_check_branch
          %100 = sbr.rel (%p98) target = $region32
        $region31: #{tpu_custom_call.1} parent=23 // pred_region
          %s102 = ssub.s32 128, 128
          %103 = vsyncadd [#allocation4], %s102
          %s105 = sshll.u32 [#allocation5], 4
          %s106 = int_to_ptr.vmem [resolvable:$true] %s105
          %108 = dma.vmem_to_hbm [thread:$0]  %s106, 128, %s1, [#allocation4]
        $region32: #{tpu_custom_call.1} parent=23 // pred_fallthru
          _
        // Predicated region
        $region33: #{tpu_custom_call.1} parent=23 // pred_check
          %p109 = pneg %p48
        $region34: #{tpu_custom_call.1} parent=23 // pred_check_branch
          %111 = sbr.rel (%p109) target = $region36
        $region35: #{tpu_custom_call.1} parent=23 // pred_region
          %112 = dma.done [#allocation4], 128
        $region36: #{tpu_custom_call.1} parent=23 // pred_fallthru
          _
      $region24: #{tpu_custom_call.1} parent=5 // pred_fallthru
        _
      %p113 = scmp.le.s32.totalorder 2, %s9
      // Predicated region
      $region37: #{tpu_custom_call.1} parent=5 // pred_check
        %p114 = pneg %p113
      $region38: #{tpu_custom_call.1} parent=5 // pred_check_branch
        %116 = sbr.rel (%p114) target = $region40
      $region39: #{tpu_custom_call.1} parent=5 // pred_region
        %s117 = ssub.s32 %s9, 2
      $region40: #{tpu_custom_call.1} parent=5 // pred_fallthru
        _
    $region6: #{tpu_custom_call.1} parent=1 // loop_footer
      %s13 = sadd.s32 1, %s9
    $region7: #{tpu_custom_call.1} parent=1 // loop_footer_branch
      %8 = sbr.rel target = $region3
    $region8: #{tpu_custom_call.1} parent=1 // loop_exit
      _
    %118 = vsyncpa [#allocation3], 1
    %s119 = scalar_lea.sflag [#allocation3], 1
    %120 = vsyncpa %s119, 1
    %121 = vsyncpa [#allocation4], 1
    %s122 = scalar_lea.sflag [#allocation4], 1
    %123 = vsyncpa %s122, 1

// kernel: tpu_custom_call.1
$region0: #{tpu_custom_call.1}
  #allocation0 [shape = 'u32[]', space=smem, size = 0x4, offset = 0x4, fixed_abs, tag = 'smem constant byte address 0x4 - core index']
  #allocation1 [shape = 'u32[144,128]{1,0:T(1,128)}', space=vmem, size = 0x12000, scoped, tag = 'internal scratch']
  %s0 = inlined_call_operand.hbm [shape: bf16[128,256], index: 0, kind: input, shape index: {}]
  %s1 = inlined_call_operand.hbm [shape: bf16[256,256], index: 1, kind: input, shape index: {}]
  %s2 = inlined_call_operand.hbm [shape: s16[128,256], index: 2, kind: output, shape index: {}]
  %s3 = sld [smem:[#allocation0]]
  $region49: #{tpu_custom_call.1} parent=0
    _
  %s5 = ssub.s32 1, %s3
  %s6 = scalar_select 0, %s5, %s3
  $region1: #{tpu_custom_call.1} parent=0
    #allocation2 [shape = 'u8[65536]{0}', space=vmem, size = 0x10000, scoped, tag = 'input window, operand 0, single buffered']
    #allocation3 [shape = 's32[2]{0}', space=sflag, size = 0x8, scoped, tag = 'scoped memory for tpu_custom_call.1']
    #allocation4 [shape = 's32[2]{0}', space=sflag, size = 0x8, scoped, tag = 'scoped memory for tpu_custom_call.1']
    #allocation5 [shape = 'u8[131072]{0}', space=vmem, size = 0x20000, scoped, tag = 'input window, operand 1']
    #allocation6 [shape = 's32[2]{0}', space=sflag, size = 0x8, scoped, tag = 'scoped memory for tpu_custom_call.1']
    #allocation7 [shape = 'u8[65536]{0}', space=vmem, size = 0x10000, scoped, tag = 'output window, operand 0']
    %7 = vsyncpa [#allocation3], 0
    %8 = vsyncpa [#allocation6], 0
    %s9 = scalar_lea.sflag [#allocation6], 1
    %10 = vsyncpa %s9, 0
    %11 = vsyncpa [#allocation4], 0
    %s12 = scalar_lea.sflag [#allocation4], 1
    %13 = vsyncpa %s12, 0
    loop: start=0, step=1, limit=4
    $region2: #{tpu_custom_call.1} parent=1 // loop_pre_header
      _
    $region3: #{tpu_custom_call.1} parent=1 // loop_header
      %s15 = sphi 0, %s19
      %p16 = scmp.ge.s32.totalorder %s15, 4
      %s23 = sphi 0, %s23
      %s25 = sphi 0, %s23
      %s26 = sphi 0, %s25
      %s40 = sphi 0, %s26
      %s46 = sphi 0, %s48
      %s49 = sphi 0, %s46
      %s50 = sphi 0, %s49
      %s66 = sphi 0, %s50
      %s72 = sphi 0, %s74
      %s75 = sphi 0, %s72
      %s76 = sphi 0, %s75
      %s92 = sphi 0, %s76
    $region4: #{tpu_custom_call.1} parent=1 // loop_header_branch
      %18 = sbr.rel (%p16) target = $region8
    $region5: #{tpu_custom_call.1} parent=1 // loop_body
      %s20 = ssub.s32 %s15, 1
      %s21 = ssub.s32 %s15, 2
      %s22 = sadd.s32 %s15, 1
      %s24 = sadd.s32 %s23, 1
      %p27 = scmp.eq.s32.totalorder %s15, 1
      %p28 = scmp.ne.s32.totalorder %s23, %s25
      %p29 = scmp.eq.s32.totalorder %s15, 0
      %p30 = por %p28, %p29
      %p31 = scmp.ne.s32.totalorder %s23, %s25
      %p32 = scmp.eq.s32.totalorder %s20, 1
      %p33 = por %p31, %p32
      %p34 = scmp.ne.s32.totalorder %s25, %s26
      %p35 = scmp.eq.s32.totalorder %s20, 0
      %p36 = por %p34, %p35
      %p37 = scmp.ne.s32.totalorder %s25, %s26
      %p38 = scmp.eq.s32.totalorder %s21, 1
      %p39 = por %p37, %p38
      %p41 = scmp.ne.s32.totalorder %s26, %s40
      %p42 = scmp.eq.s32.totalorder %s21, 0
      %p43 = por %p41, %p42
      %s44 = ssub.s32 %s15, %s22
      %p45 = scmp.eq.s32.totalorder %s44, 0
      %s47 = sadd.s32 %s46, 1
      %s48 = scalar_select %p45, %s46, %s47
      %p51 = pneg %p45
      %p52 = scmp.eq.s32.totalorder %s15, 1
      %p53 = por %p51, %p52
      %p54 = scmp.ne.s32.totalorder %s46, %s49
      %p55 = scmp.eq.s32.totalorder %s15, 0
      %p56 = por %p54, %p55
      %p57 = scmp.ne.s32.totalorder %s46, %s49
      %p58 = scmp.eq.s32.totalorder %s20, 1
      %p59 = por %p57, %p58
      %p60 = scmp.ne.s32.totalorder %s49, %s50
      %p61 = scmp.eq.s32.totalorder %s20, 0
      %p62 = por %p60, %p61
      %p63 = scmp.ne.s32.totalorder %s49, %s50
      %p64 = scmp.eq.s32.totalorder %s21, 1
      %p65 = por %p63, %p64
      %p67 = scmp.ne.s32.totalorder %s50, %s66
      %p68 = scmp.eq.s32.totalorder %s21, 0
      %p69 = por %p67, %p68
      %s70 = ssub.s32 %s15, %s22
      %p71 = scmp.eq.s32.totalorder %s70, 0
      %s73 = sadd.s32 %s72, 1
      %s74 = scalar_select %p71, %s72, %s73
      %p77 = pneg %p71
      %p78 = scmp.eq.s32.totalorder %s15, 1
      %p79 = por %p77, %p78
      %p80 = scmp.ne.s32.totalorder %s72, %s75
      %p81 = scmp.eq.s32.totalorder %s15, 0
      %p82 = por %p80, %p81
      %p83 = scmp.ne.s32.totalorder %s72, %s75
      %p84 = scmp.eq.s32.totalorder %s20, 1
      %p85 = por %p83, %p84
      %p86 = scmp.ne.s32.totalorder %s75, %s76
      %p87 = scmp.eq.s32.totalorder %s20, 0
      %p88 = por %p86, %p87
      %p89 = scmp.ne.s32.totalorder %s75, %s76
      %p90 = scmp.eq.s32.totalorder %s21, 1
      %p91 = por %p89, %p90
      %p93 = scmp.ne.s32.totalorder %s76, %s92
      %p94 = scmp.eq.s32.totalorder %s21, 0
      %p95 = por %p93, %p94
      %p96 = scmp.le.s32.totalorder 1, %s15
      %p97 = scmp.lt.s32.totalorder %s15, 3
      %p98 = pnand %p96, %p97
      %p99 = pneg %p98
      // Predicated region
      $region9: #{tpu_custom_call.1} parent=5 // pred_check
        _
      $region10: #{tpu_custom_call.1} parent=5 // pred_check_branch
        %101 = sbr.rel (%p98) target = $region12
      $region11: #{tpu_custom_call.1} parent=5 // pred_region
        %s102 = ssub.s32 %s15, 1
        // Predicated region
        $region13: #{tpu_custom_call.1} parent=11 // pred_check
          %p103 = pneg %p36
        $region14: #{tpu_custom_call.1} parent=11 // pred_check_branch
          %105 = sbr.rel (%p103) target = $region16
        $region15: #{tpu_custom_call.1} parent=11 // pred_region
          %s107 = ssub.s32 2048, 2048
          %108 = vsyncadd [#allocation3], %s107
          %s109 = sshll.u32 [#allocation2], 4
          %s110 = int_to_ptr.vmem [resolvable:$true] %s109
          %115 = dma.hbm_to_vmem [thread:$0]  %s0, 2048, %s110, [#allocation3], 128, 128, 8
        $region16: #{tpu_custom_call.1} parent=11 // pred_fallthru
          _
      $region12: #{tpu_custom_call.1} parent=5 // pred_fallthru
        _
      %p116 = scmp.lt.s32.totalorder %s15, 2
      // Predicated region
      $region17: #{tpu_custom_call.1} parent=5 // pred_check
        %p117 = pneg %p116
      $region18: #{tpu_custom_call.1} parent=5 // pred_check_branch
        %119 = sbr.rel (%p117) target = $region20
      $region19: #{tpu_custom_call.1} parent=5 // pred_region
        // Predicated region
        $region21: #{tpu_custom_call.1} parent=19 // pred_check
          %p120 = pneg %p56
        $region22: #{tpu_custom_call.1} parent=19 // pred_check_branch
          %122 = sbr.rel (%p120) target = $region24
        $region23: #{tpu_custom_call.1} parent=19 // pred_region
          %s123 = sand.u32 %s46, 1
          %s124 = scalar_lea.sflag [#allocation6], %s123
          %s125 = sand.u32 %s46, 1
          %s126 = smul.addr %s125, 128
          %s127 = scalar_lea.vmem [#allocation5], %s126
          %s129 = ssub.s32 2048, 2048
          %130 = vsyncadd %s124, %s129
          %s131 = smul.addr %s15, 64
          %s132 = scalar_lea.hbm %s1, %s131
          %s133 = sshll.u32 %s127, 4
          %s134 = int_to_ptr.vmem [resolvable:$true] %s133
          %139 = dma.hbm_to_vmem [thread:$0]  %s132, 2048, %s134, %s124, 128, 64, 4
        $region24: #{tpu_custom_call.1} parent=19 // pred_fallthru
          _
      $region20: #{tpu_custom_call.1} parent=5 // pred_fallthru
        _
      %p140 = scmp.le.s32.totalorder 1, %s15
      %p141 = scmp.lt.s32.totalorder %s15, 3
      %p142 = pnand %p140, %p141
      %p143 = pneg %p142
      // Predicated region
      $region25: #{tpu_custom_call.1} parent=5 // pred_check
        _
      $region26: #{tpu_custom_call.1} parent=5 // pred_check_branch
        %145 = sbr.rel (%p142) target = $region28
      $region27: #{tpu_custom_call.1} parent=5 // pred_region
        %s146 = ssub.s32 %s15, 1
        // Predicated region
        $region29: #{tpu_custom_call.1} parent=27 // pred_check
          %p147 = pneg %p36
        $region30: #{tpu_custom_call.1} parent=27 // pred_check_branch
          %149 = sbr.rel (%p147) target = $region32
        $region31: #{tpu_custom_call.1} parent=27 // pred_region
          %150 = dma.done [#allocation3], 2048
        $region32: #{tpu_custom_call.1} parent=27 // pred_fallthru
          _
        %s151 = sand.u32 %s49, 1
        %s152 = scalar_lea.sflag [#allocation6], %s151
        %s153 = sand.u32 %s49, 1
        %s154 = smul.addr %s153, 128
        %s155 = scalar_lea.vmem [#allocation5], %s154
        // Predicated region
        $region33: #{tpu_custom_call.1} parent=27 // pred_check
          %p156 = pneg %p62
        $region34: #{tpu_custom_call.1} parent=27 // pred_check_branch
          %158 = sbr.rel (%p156) target = $region36
        $region35: #{tpu_custom_call.1} parent=27 // pred_region
          %159 = dma.done %s152, 2048
        $region36: #{tpu_custom_call.1} parent=27 // pred_fallthru
          _
        %p160 = pneg %p36
        %p161 = pneg %p33
        %s162 = sand.u32 %s49, 1
        %s163 = scalar_lea.sflag [#allocation6], %s162
        %s164 = sand.u32 %s49, 1
        %s165 = smul.addr %s164, 128
        %s166 = scalar_lea.vmem [#allocation5], %s165
        %p167 = pneg %p62
        %p168 = pneg %p59
        %p169 = pneg %p88
        %p170 = pneg %p85
        %s171 = sand.u32 %s75, 1
        %s172 = scalar_lea.sflag [#allocation4], %s171
        %s173 = sand.u32 %s75, 1
        %s174 = smul.addr %s173, 64
        %s175 = scalar_lea.vmem [#allocation7], %s174
        %v177 = vld [vmem:[#allocation2] sm:$0xff]
        %v178 = vld [vmem:[#allocation2 + $0x8] sm:$0xff]
        %v179 = vld [vmem:[#allocation2 + $0x10] sm:$0xff]
        %v180 = vld [vmem:[#allocation2 + $0x18] sm:$0xff]
        %v181 = vld [vmem:[#allocation2 + $0x20] sm:$0xff]
        %v182 = vld [vmem:[#allocation2 + $0x28] sm:$0xff]
        %v183 = vld [vmem:[#allocation2 + $0x30] sm:$0xff]
        %v184 = vld [vmem:[#allocation2 + $0x38] sm:$0xff]
        %v185 = vld [vmem:[#allocation2 + $0x40] sm:$0xff]
        %v186 = vld [vmem:[#allocation2 + $0x48] sm:$0xff]
        %v187 = vld [vmem:[#allocation2 + $0x50] sm:$0xff]
        %v188 = vld [vmem:[#allocation2 + $0x58] sm:$0xff]
        %v189 = vld [vmem:[#allocation2 + $0x60] sm:$0xff]
        %v190 = vld [vmem:[#allocation2 + $0x68] sm:$0xff]
        %v191 = vld [vmem:[#allocation2 + $0x70] sm:$0xff]
        %v192 = vld [vmem:[#allocation2 + $0x78] sm:$0xff]
        %v193 = vld [vmem:[%s155] sm:$0xf]
        %v194 = vld [vmem:[%s155 + $0x4] sm:$0xf]
        %v195 = vld [vmem:[%s155 + $0x8] sm:$0xf]
        %v196 = vld [vmem:[%s155 + $0xc] sm:$0xf]
        %v197 = vld [vmem:[%s155 + $0x10] sm:$0xf]
        %v198 = vld [vmem:[%s155 + $0x14] sm:$0xf]
        %v199 = vld [vmem:[%s155 + $0x18] sm:$0xf]
        %v200 = vld [vmem:[%s155 + $0x1c] sm:$0xf]
        %v201 = vld [vmem:[%s155 + $0x20] sm:$0xf]
        %v202 = vld [vmem:[%s155 + $0x24] sm:$0xf]
        %v203 = vld [vmem:[%s155 + $0x28] sm:$0xf]
        %v204 = vld [vmem:[%s155 + $0x2c] sm:$0xf]
        %v205 = vld [vmem:[%s155 + $0x30] sm:$0xf]
        %v206 = vld [vmem:[%s155 + $0x34] sm:$0xf]
        %v207 = vld [vmem:[%s155 + $0x38] sm:$0xf]
        %v208 = vld [vmem:[%s155 + $0x3c] sm:$0xf]
        %v209 = vld [vmem:[%s155 + $0x40] sm:$0xf]
        %v210 = vld [vmem:[%s155 + $0x44] sm:$0xf]
        %v211 = vld [vmem:[%s155 + $0x48] sm:$0xf]
        %v212 = vld [vmem:[%s155 + $0x4c] sm:$0xf]
        %v213 = vld [vmem:[%s155 + $0x50] sm:$0xf]
        %v214 = vld [vmem:[%s155 + $0x54] sm:$0xf]
        %v215 = vld [vmem:[%s155 + $0x58] sm:$0xf]
        %v216 = vld [vmem:[%s155 + $0x5c] sm:$0xf]
        %v217 = vld [vmem:[%s155 + $0x60] sm:$0xf]
        %v218 = vld [vmem:[%s155 + $0x64] sm:$0xf]
        %v219 = vld [vmem:[%s155 + $0x68] sm:$0xf]
        %v220 = vld [vmem:[%s155 + $0x6c] sm:$0xf]
        %v221 = vld [vmem:[%s155 + $0x70] sm:$0xf]
        %v222 = vld [vmem:[%s155 + $0x74] sm:$0xf]
        %v223 = vld [vmem:[%s155 + $0x78] sm:$0xf]
        %v224 = vld [vmem:[%s155 + $0x7c] sm:$0xf]
        %v241 = vunpack.c.l.b16 %v177
        %v242 = vunpack.c.h.b16 %v177
        %v243 = vunpack.c.l.b16 %v178
        %v244 = vunpack.c.h.b16 %v178
        %v245 = vunpack.c.l.b16 %v179
        %v246 = vunpack.c.h.b16 %v179
        %v247 = vunpack.c.l.b16 %v180
        %v248 = vunpack.c.h.b16 %v180
        %v249 = vunpack.c.l.b16 %v181
        %v250 = vunpack.c.h.b16 %v181
        %v251 = vunpack.c.l.b16 %v182
        %v252 = vunpack.c.h.b16 %v182
        %v253 = vunpack.c.l.b16 %v183
        %v254 = vunpack.c.h.b16 %v183
        %v255 = vunpack.c.l.b16 %v184
        %v256 = vunpack.c.h.b16 %v184
        %v257 = vunpack.c.l.b16 %v185
        %v258 = vunpack.c.h.b16 %v185
        %v259 = vunpack.c.l.b16 %v186
        %v260 = vunpack.c.h.b16 %v186
        %v261 = vunpack.c.l.b16 %v187
        %v262 = vunpack.c.h.b16 %v187
        %v263 = vunpack.c.l.b16 %v188
        %v264 = vunpack.c.h.b16 %v188
        %v265 = vunpack.c.l.b16 %v189
        %v266 = vunpack.c.h.b16 %v189
        %v267 = vunpack.c.l.b16 %v190
        %v268 = vunpack.c.h.b16 %v190
        %v269 = vunpack.c.l.b16 %v191
        %v270 = vunpack.c.h.b16 %v191
        %v271 = vunpack.c.l.b16 %v192
        %v272 = vunpack.c.h.b16 %v192
        %v273 = vpack.c.b16 %v243, %v241
        %v274 = vpack.c.b16 %v244, %v242
        %v275 = vpack.c.b16 %v247, %v245
        %v276 = vpack.c.b16 %v248, %v246
        %v277 = vpack.c.b16 %v251, %v249
        %v278 = vpack.c.b16 %v252, %v250
        %v279 = vpack.c.b16 %v255, %v253
        %v280 = vpack.c.b16 %v256, %v254
        %v281 = vpack.c.b16 %v259, %v257
        %v282 = vpack.c.b16 %v260, %v258
        %v283 = vpack.c.b16 %v263, %v261
        %v284 = vpack.c.b16 %v264, %v262
        %v285 = vpack.c.b16 %v267, %v265
        %v286 = vpack.c.b16 %v268, %v266
        %v287 = vpack.c.b16 %v271, %v269
        %v288 = vpack.c.b16 %v272, %v270
        %v337 = vunpack.c.l.b16 %v193
        %v338 = vunpack.c.l.b16 %v194
        %v339 = vunpack.c.l.b16 %v195
        %v340 = vunpack.c.l.b16 %v196
        %v341 = vunpack.c.l.b16 %v197
        %v342 = vunpack.c.l.b16 %v198
        %v343 = vunpack.c.l.b16 %v199
        %v344 = vunpack.c.l.b16 %v200
        %v345 = vunpack.c.l.b16 %v201
        %v346 = vunpack.c.l.b16 %v202
        %v347 = vunpack.c.l.b16 %v203
        %v348 = vunpack.c.l.b16 %v204
        %v349 = vunpack.c.l.b16 %v205
        %v350 = vunpack.c.l.b16 %v206
        %v351 = vunpack.c.l.b16 %v207
        %v352 = vunpack.c.l.b16 %v208
        %v353 = vunpack.c.l.b16 %v209
        %v354 = vunpack.c.l.b16 %v210
        %v355 = vunpack.c.l.b16 %v211
        %v356 = vunpack.c.l.b16 %v212
        %v357 = vunpack.c.l.b16 %v213
        %v358 = vunpack.c.l.b16 %v214
        %v359 = vunpack.c.l.b16 %v215
        %v360 = vunpack.c.l.b16 %v216
        %v361 = vunpack.c.l.b16 %v217
        %v362 = vunpack.c.l.b16 %v218
        %v363 = vunpack.c.l.b16 %v219
        %v364 = vunpack.c.l.b16 %v220
        %v365 = vunpack.c.l.b16 %v221
        %v366 = vunpack.c.l.b16 %v222
        %v367 = vunpack.c.l.b16 %v223
        %v368 = vunpack.c.l.b16 %v224
        %v369 = vpack.c.b16 %v338, %v337
        %v370 = vpack.c.b16 %v340, %v339
        %v371 = vpack.c.b16 %v342, %v341
        %v372 = vpack.c.b16 %v344, %v343
        %v373 = vpack.c.b16 %v346, %v345
        %v374 = vpack.c.b16 %v348, %v347
        %v375 = vpack.c.b16 %v350, %v349
        %v376 = vpack.c.b16 %v352, %v351
        %v377 = vpack.c.b16 %v354, %v353
        %v378 = vpack.c.b16 %v356, %v355
        %v379 = vpack.c.b16 %v358, %v357
        %v380 = vpack.c.b16 %v360, %v359
        %v381 = vpack.c.b16 %v362, %v361
        %v382 = vpack.c.b16 %v364, %v363
        %v383 = vpack.c.b16 %v366, %v365
        %v384 = vpack.c.b16 %v368, %v367
        %401 = vmatprep.subr.bf16.mxu0 0
        %402 = vmatpush1.bf16.msra.mxu0 %v376
        %403 = vmatprep.subr.bf16.mxu0 0
        %404 = vmatpush1.bf16.msra.mxu0 %v375
        %405 = vmatprep.subr.bf16.mxu0 0
        %406 = vmatpush1.bf16.msra.mxu0 %v374
        %407 = vmatprep.subr.bf16.mxu0 0
        %408 = vmatpush1.bf16.msra.mxu0 %v373
        %409 = vmatprep.subr.bf16.mxu0 0
        %410 = vmatpush1.bf16.msra.mxu0 %v372
        %411 = vmatprep.subr.bf16.mxu0 0
        %412 = vmatpush1.bf16.msra.mxu0 %v371
        %413 = vmatprep.subr.bf16.mxu0 0
        %414 = vmatpush1.bf16.msra.mxu0 %v370
        %415 = vmatprep.subr.bf16.mxu0 0
        %416 = vmatpush1.bf16.msra.mxu0 %v369
        %417 = vmatprep.subr.bf16.mxu0 0
        %418 = vmatpush2.bf16.msra.mxu0 %v384
        %419 = vmatprep.subr.bf16.mxu0 0
        %420 = vmatpush2.bf16.msra.mxu0 %v383
        %421 = vmatprep.subr.bf16.mxu0 0
        %422 = vmatpush2.bf16.msra.mxu0 %v382
        %423 = vmatprep.subr.bf16.mxu0 0
        %424 = vmatpush2.bf16.msra.mxu0 %v381
        %425 = vmatprep.subr.bf16.mxu0 0
        %426 = vmatpush2.bf16.msra.mxu0 %v380
        %427 = vmatprep.subr.bf16.mxu0 0
        %428 = vmatpush2.bf16.msra.mxu0 %v379
        %429 = vmatprep.subr.bf16.mxu0 0
        %430 = vmatpush2.bf16.msra.mxu0 %v378
        %431 = vmatprep.subr.bf16.mxu0 0
        %432 = vmatpush2.bf16.msra.mxu0 %v377
        %433 = vmatprep.mubr.bf16.mxu0 %v274
        %434 = vmatmul.mubr.bf16.gmra.mxu0 %v273
        %v435 = vpop.f32.mrf.mxu0
        %v436 = vadd.f32 0.0, %v435
        %v437 = vpop.f32.mrf.mxu0
        %v438 = vpop.f32.mrf.mxu0
        %v439 = vadd.f32 0.0, %v438
        %v440 = vpop.f32.mrf.mxu0
        %441 = vmatprep.mubr.bf16.mxu0 %v276
        %442 = vmatmul.mubr.bf16.gmra.mxu0 %v275
        %v443 = vpop.f32.mrf.mxu0
        %v444 = vadd.f32 0.0, %v443
        %v445 = vpop.f32.mrf.mxu0
        %v446 = vpop.f32.mrf.mxu0
        %v447 = vadd.f32 0.0, %v446
        %v448 = vpop.f32.mrf.mxu0
        %449 = vmatprep.mubr.bf16.mxu0 %v278
        %450 = vmatmul.mubr.bf16.gmra.mxu0 %v277
        %v451 = vpop.f32.mrf.mxu0
        %v452 = vadd.f32 0.0, %v451
        %v453 = vpop.f32.mrf.mxu0
        %v454 = vpop.f32.mrf.mxu0
        %v455 = vadd.f32 0.0, %v454
        %v456 = vpop.f32.mrf.mxu0
        %457 = vmatprep.mubr.bf16.mxu0 %v280
        %458 = vmatmul.mubr.bf16.gmra.mxu0 %v279
        %v459 = vpop.f32.mrf.mxu0
        %v460 = vadd.f32 0.0, %v459
        %v461 = vpop.f32.mrf.mxu0
        %v462 = vpop.f32.mrf.mxu0
        %v463 = vadd.f32 0.0, %v462
        %v464 = vpop.f32.mrf.mxu0
        %465 = vmatprep.mubr.bf16.mxu0 %v282
        %466 = vmatmul.mubr.bf16.gmra.mxu0 %v281
        %v467 = vpop.f32.mrf.mxu0
        %v468 = vadd.f32 0.0, %v467
        %v469 = vpop.f32.mrf.mxu0
        %v470 = vpop.f32.mrf.mxu0
        %v471 = vadd.f32 0.0, %v470
        %v472 = vpop.f32.mrf.mxu0
        %473 = vmatprep.mubr.bf16.mxu0 %v284
        %474 = vmatmul.mubr.bf16.gmra.mxu0 %v283
        %v475 = vpop.f32.mrf.mxu0
        %v476 = vadd.f32 0.0, %v475
        %v477 = vpop.f32.mrf.mxu0
        %v478 = vpop.f32.mrf.mxu0
        %v479 = vadd.f32 0.0, %v478
        %v480 = vpop.f32.mrf.mxu0
        %481 = vmatprep.mubr.bf16.mxu0 %v286
        %482 = vmatmul.mubr.bf16.gmra.mxu0 %v285
        %v483 = vpop.f32.mrf.mxu0
        %v484 = vadd.f32 0.0, %v483
        %v485 = vpop.f32.mrf.mxu0
        %v486 = vpop.f32.mrf.mxu0
        %v487 = vadd.f32 0.0, %v486
        %v488 = vpop.f32.mrf.mxu0
        %489 = vmatprep.mubr.bf16.mxu0 %v288
        %490 = vmatmul.mubr.bf16.gmra.mxu0 %v287
        %v491 = vpop.f32.mrf.mxu0
        %v492 = vadd.f32 0.0, %v491
        %v493 = vpop.f32.mrf.mxu0
        %v494 = vpop.f32.mrf.mxu0
        %v495 = vadd.f32 0.0, %v494
        %v496 = vpop.f32.mrf.mxu0
        %497 = vdwg.mxu0
        %v498 = vadd.f32 %v436, %v439
        %v499 = vadd.f32 %v498, %v444
        %v500 = vadd.f32 %v499, %v447
        %v501 = vadd.f32 %v500, %v452
        %v502 = vadd.f32 %v501, %v455
        %v503 = vadd.f32 %v502, %v460
        %v504 = vadd.f32 %v503, %v463
        %v505 = vadd.f32 %v504, %v468
        %v506 = vadd.f32 %v505, %v471
        %v507 = vadd.f32 %v506, %v476
        %v508 = vadd.f32 %v507, %v479
        %v509 = vadd.f32 %v508, %v484
        %v510 = vadd.f32 %v509, %v487
        %v511 = vadd.f32 %v510, %v492
        %v512 = vadd.f32 %v511, %v495
        %v513 = vrot.slane %v512, 4
        %v514 = vadd.f32 %v512, %v513
        %v515 = vrot.slane %v514, 2
        %v516 = vadd.f32 %v514, %v515
        %v517 = vrot.slane %v516, 1
        %v518 = vadd.f32 %v516, %v517
        %v519 = vmul.f32 %v518, 0.0078125
        %v520 = vmul.f32 %v436, %v436
        %v521 = vmul.f32 %v439, %v439
        %v522 = vmul.f32 %v444, %v444
        %v523 = vmul.f32 %v447, %v447
        %v524 = vmul.f32 %v452, %v452
        %v525 = vmul.f32 %v455, %v455
        %v526 = vmul.f32 %v460, %v460
        %v527 = vmul.f32 %v463, %v463
        %v528 = vmul.f32 %v468, %v468
        %v529 = vmul.f32 %v471, %v471
        %v530 = vmul.f32 %v476, %v476
        %v531 = vmul.f32 %v479, %v479
        %v532 = vmul.f32 %v484, %v484
        %v533 = vmul.f32 %v487, %v487
        %v534 = vmul.f32 %v492, %v492
        %v535 = vmul.f32 %v495, %v495
        %v536 = vadd.f32 %v520, %v521
        %v537 = vadd.f32 %v536, %v522
        %v538 = vadd.f32 %v537, %v523
        %v539 = vadd.f32 %v538, %v524
        %v540 = vadd.f32 %v539, %v525
        %v541 = vadd.f32 %v540, %v526
        %v542 = vadd.f32 %v541, %v527
        %v543 = vadd.f32 %v542, %v528
        %v544 = vadd.f32 %v543, %v529
        %v545 = vadd.f32 %v544, %v530
        %v546 = vadd.f32 %v545, %v531
        %v547 = vadd.f32 %v546, %v532
        %v548 = vadd.f32 %v547, %v533
        %v549 = vadd.f32 %v548, %v534
        %v550 = vadd.f32 %v549, %v535
        %v551 = vrot.slane %v550, 4
        %v552 = vadd.f32 %v550, %v551
        %v553 = vrot.slane %v552, 2
        %v554 = vadd.f32 %v552, %v553
        %v555 = vrot.slane %v554, 1
        %v556 = vadd.f32 %v554, %v555
        %v557 = vmul.f32 %v556, 0.0078125
        %v558 = vmul.f32 %v519, %v519
        %v559 = vsub.f32 %v557, %v558
        %v560 = vmax.f32 %v559, 0.0
        %v561 = vsub.f32 %v436, %v519
        %v562 = vsub.f32 %v439, %v519
        %v563 = vsub.f32 %v444, %v519
        %v564 = vsub.f32 %v447, %v519
        %v565 = vsub.f32 %v452, %v519
        %v566 = vsub.f32 %v455, %v519
        %v567 = vsub.f32 %v460, %v519
        %v568 = vsub.f32 %v463, %v519
        %v569 = vsub.f32 %v468, %v519
        %v570 = vsub.f32 %v471, %v519
        %v571 = vsub.f32 %v476, %v519
        %v572 = vsub.f32 %v479, %v519
        %v573 = vsub.f32 %v484, %v519
        %v574 = vsub.f32 %v487, %v519
        %v575 = vsub.f32 %v492, %v519
        %v576 = vsub.f32 %v495, %v519
        %v577 = vadd.f32 %v560, 1e-05
        %v578 = vrsqrt.pop %v577
        %v579 = vmul.f32 %v561, %v578
        %v580 = vmul.f32 %v562, %v578
        %v581 = vmul.f32 %v563, %v578
        %v582 = vmul.f32 %v564, %v578
        %v583 = vmul.f32 %v565, %v578
        %v584 = vmul.f32 %v566, %v578
        %v585 = vmul.f32 %v567, %v578
        %v586 = vmul.f32 %v568, %v578
        %v587 = vmul.f32 %v569, %v578
        %v588 = vmul.f32 %v570, %v578
        %v589 = vmul.f32 %v571, %v578
        %v590 = vmul.f32 %v572, %v578
        %v591 = vmul.f32 %v573, %v578
        %v592 = vmul.f32 %v574, %v578
        %v593 = vmul.f32 %v575, %v578
        %v594 = vmul.f32 %v576, %v578
        %v595 = vcvt.f32.s32.to.zero.pseudo %v579
        %v596 = vcvt.f32.s32.to.zero.pseudo %v580
        %v597 = vcvt.f32.s32.to.zero.pseudo %v581
        %v598 = vcvt.f32.s32.to.zero.pseudo %v582
        %v599 = vcvt.f32.s32.to.zero.pseudo %v583
        %v600 = vcvt.f32.s32.to.zero.pseudo %v584
        %v601 = vcvt.f32.s32.to.zero.pseudo %v585
        %v602 = vcvt.f32.s32.to.zero.pseudo %v586
        %v603 = vcvt.f32.s32.to.zero.pseudo %v587
        %v604 = vcvt.f32.s32.to.zero.pseudo %v588
        %v605 = vcvt.f32.s32.to.zero.pseudo %v589
        %v606 = vcvt.f32.s32.to.zero.pseudo %v590
        %v607 = vcvt.f32.s32.to.zero.pseudo %v591
        %v608 = vcvt.f32.s32.to.zero.pseudo %v592
        %v609 = vcvt.f32.s32.to.zero.pseudo %v593
        %v610 = vcvt.f32.s32.to.zero.pseudo %v594
        %v611 = vpack.c.b16 %v595, %v595
        %v612 = vpack.c.b16 %v596, %v596
        %v613 = vpack.c.b16 %v597, %v597
        %v614 = vpack.c.b16 %v598, %v598
        %v615 = vpack.c.b16 %v599, %v599
        %v616 = vpack.c.b16 %v600, %v600
        %v617 = vpack.c.b16 %v601, %v601
        %v618 = vpack.c.b16 %v602, %v602
        %v619 = vpack.c.b16 %v603, %v603
        %v620 = vpack.c.b16 %v604, %v604
        %v621 = vpack.c.b16 %v605, %v605
        %v622 = vpack.c.b16 %v606, %v606
        %v623 = vpack.c.b16 %v607, %v607
        %v624 = vpack.c.b16 %v608, %v608
        %v625 = vpack.c.b16 %v609, %v609
        %v626 = vpack.c.b16 %v610, %v610
        %627 = vst [vmem:[%s175] sm:$0xf] %v611
        %628 = vst [vmem:[%s175 + $0x4] sm:$0xf] %v612
        %629 = vst [vmem:[%s175 + $0x8] sm:$0xf] %v613
        %630 = vst [vmem:[%s175 + $0xc] sm:$0xf] %v614
        %631 = vst [vmem:[%s175 + $0x10] sm:$0xf] %v615
        %632 = vst [vmem:[%s175 + $0x14] sm:$0xf] %v616
        %633 = vst [vmem:[%s175 + $0x18] sm:$0xf] %v617
        %634 = vst [vmem:[%s175 + $0x1c] sm:$0xf] %v618
        %635 = vst [vmem:[%s175 + $0x20] sm:$0xf] %v619
        %636 = vst [vmem:[%s175 + $0x24] sm:$0xf] %v620
        %637 = vst [vmem:[%s175 + $0x28] sm:$0xf] %v621
        %638 = vst [vmem:[%s175 + $0x2c] sm:$0xf] %v622
        %639 = vst [vmem:[%s175 + $0x30] sm:$0xf] %v623
        %640 = vst [vmem:[%s175 + $0x34] sm:$0xf] %v624
        %641 = vst [vmem:[%s175 + $0x38] sm:$0xf] %v625
        %642 = vst [vmem:[%s175 + $0x3c] sm:$0xf] %v626
        %s643 = sand.u32 %s75, 1
        %s644 = scalar_lea.sflag [#allocation4], %s643
        %s645 = sand.u32 %s75, 1
        %s646 = smul.addr %s645, 64
        %s647 = scalar_lea.vmem [#allocation7], %s646
        // Predicated region
        $region37: #{tpu_custom_call.1} parent=27 // pred_check
          %p648 = pneg %p85
        $region38: #{tpu_custom_call.1} parent=27 // pred_check_branch
          %650 = sbr.rel (%p648) target = $region40
        $region39: #{tpu_custom_call.1} parent=27 // pred_region
          %s652 = ssub.s32 1024, 1024
          %653 = vsyncadd %s644, %s652
          %s654 = smul.addr %s20, 64
          %s655 = scalar_lea.hbm %s2, %s654
          %s656 = sshll.u32 %s647, 4
          %s657 = int_to_ptr.vmem [resolvable:$true] %s656
          %662 = dma.vmem_to_hbm [thread:$0]  %s657, 1024, %s655, %s644, 64, 128, 4
        $region40: #{tpu_custom_call.1} parent=27 // pred_fallthru
          _
      $region28: #{tpu_custom_call.1} parent=5 // pred_fallthru
        _
      %p663 = scmp.le.s32.totalorder 2, %s15
      // Predicated region
      $region41: #{tpu_custom_call.1} parent=5 // pred_check
        %p664 = pneg %p663
      $region42: #{tpu_custom_call.1} parent=5 // pred_check_branch
        %666 = sbr.rel (%p664) target = $region44
      $region43: #{tpu_custom_call.1} parent=5 // pred_region
        %s667 = ssub.s32 %s15, 2
        // Predicated region
        $region45: #{tpu_custom_call.1} parent=43 // pred_check
          %p668 = pneg %p91
        $region46: #{tpu_custom_call.1} parent=43 // pred_check_branch
          %670 = sbr.rel (%p668) target = $region48
        $region47: #{tpu_custom_call.1} parent=43 // pred_region
          %s671 = sand.u32 %s76, 1
          %s672 = scalar_lea.sflag [#allocation4], %s671
          %s673 = sand.u32 %s76, 1
          %s674 = smul.addr %s673, 64
          %s675 = scalar_lea.vmem [#allocation7], %s674
          %676 = dma.done %s672, 1024
        $region48: #{tpu_custom_call.1} parent=43 // pred_fallthru
          _
      $region44: #{tpu_custom_call.1} parent=5 // pred_fallthru
        _
    $region6: #{tpu_custom_call.1} parent=1 // loop_footer
      %s19 = sadd.s32 1, %s15
    $region7: #{tpu_custom_call.1} parent=1 // loop_footer_branch
      %14 = sbr.rel target = $region3
    $region8: #{tpu_custom_call.1} parent=1 // loop_exit
      _
    %677 = vsyncpa [#allocation3], 1
    %s678 = scalar_lea.sflag [#allocation3], 1
    %679 = vsyncpa %s678, 1
    %680 = vsyncpa [#allocation6], 1
    %s681 = scalar_lea.sflag [#allocation6], 1
    %682 = vsyncpa %s681, 1
    %683 = vsyncpa [#allocation4], 1
    %s684 = scalar_lea.sflag [#allocation4], 1
    %685 = vsyncpa %s684, 1

</llo_original>
